<compile_context>
chip_gen: v5e
topology: v5e:2x2
jax: 0.10.0
libtpu: 0.0.40
codegen_flags: <defaults>
</compile_context>

<pallas_src>
import jax
import jax.numpy as jnp
from jax.experimental import pallas as pl
from jax.experimental.pallas import tpu as pltpu


def vae_encoder_kernel(x_ref, w_ref, b_ref, eps_ref, z_ref, klp_ref):
    L = z_ref.shape[-1]

    # Single fused matmul: (TILE_B, D) @ (D, 2L) -> (TILE_B, 2L), f32 accumulate.
    h = jnp.dot(x_ref[...], w_ref[...], preferred_element_type=jnp.float32)
    h = h + b_ref[...]                       # bias kept in f32

    h1 = h[:, :L]                            # lane-aligned slice (L = 128)
    h2 = h[:, L:]

    mu = jnp.maximum(h1, 0.0)                # relu(linear1(x))
    sigma = jnp.exp(h2)                      # exp(linear2(x))

    # z = mu + sigma * eps   (epilogue entirely in f32)
    z_ref[...] = (mu + sigma * eps_ref[...]).astype(z_ref.dtype)

    # kl terms: sigma^2 + mu^2 - log(sigma) - 1/2, with log(sigma) == h2.
    kl_terms = sigma * sigma + mu * mu - h2 - 0.5
    # Lane-dense per-tile partial sums (reduce over the batch-tile rows only).
    klp_ref[...] = jnp.sum(kl_terms, axis=0).reshape(1, 1, L)


def variational_encoder(x, w1, b1, w2, b2, eps, *, tile_b=128,
                        matmul_dtype=jnp.float32):
    """x: (B, D); w1,w2: (D, L); b1,b2: (1, L); eps: (B, L).
    Returns (z, kl) where z: (B, L) float32, kl: scalar float32."""
    B, D = x.shape
    L = w1.shape[1]

    if B % tile_b != 0:
        # Fall back to a single full-batch tile if it does not divide evenly.
        tile_b = B
    grid_b = B // tile_b

    # Fuse the two linears so x goes through the MXU once per tile.
    w12 = jnp.concatenate([w1, w2], axis=1).astype(matmul_dtype)   # (D, 2L)
    b12 = jnp.concatenate([b1, b2], axis=1).astype(jnp.float32)    # (1, 2L)
    x_mm = x.astype(matmul_dtype)
    eps_f32 = eps.astype(jnp.float32)

    grid_spec = pltpu.PrefetchScalarGridSpec(
        num_scalar_prefetch=0,
        grid=(grid_b,),
        in_specs=[
            pl.BlockSpec((tile_b, D), lambda i: (i, 0)),     # x tile
            pl.BlockSpec((D, 2 * L), lambda i: (0, 0)),      # fused weight (resident)
            pl.BlockSpec((1, 2 * L), lambda i: (0, 0)),      # fused bias (resident)
            pl.BlockSpec((tile_b, L), lambda i: (i, 0)),     # eps tile
        ],
        out_specs=(
            pl.BlockSpec((tile_b, L), lambda i: (i, 0)),     # z tile
            pl.BlockSpec((1, 1, L), lambda i: (i, 0, 0)),    # per-tile KL partials
        ),
    )

    z, kl_parts = pl.pallas_call(
        vae_encoder_kernel,
        grid_spec=grid_spec,
        out_shape=(
            jax.ShapeDtypeStruct((B, L), jnp.float32),
            jax.ShapeDtypeStruct((grid_b, 1, L), jnp.float32),
        ),
        compiler_params=pltpu.CompilerParams(
            dimension_semantics=("parallel",),
            vmem_limit_bytes=32 * 1024 * 1024,
        ),
    )(x_mm, w12, b12, eps_f32)

    # Final scalar reduction of the lane-dense partials (tiny, left to XLA).
    kl = jnp.sum(kl_parts)
    return z, kl


def _reference(x, w1, b1, w2, b2, eps):
    mu = jnp.maximum(x @ w1 + b1, 0.0)
    sigma = jnp.exp(x @ w2 + b2)
    z = mu + sigma * eps
    kl = jnp.sum(sigma ** 2 + mu ** 2 - jnp.log(sigma) - 0.5)
    return z, kl


if __name__ == "__main__":
    # Small shapes consistent with the module (default: input_size=1024,
    # latent_dims=128); B chosen so the batch grid actually has >1 tile.
    B, D, L = 256, 256, 128
    TILE_B = 128

    key = jax.random.PRNGKey(0)
    kx, kw1, kb1, kw2, kb2, keps = jax.random.split(key, 6)

    # Deterministic PyTorch-style Linear init: U(-1/sqrt(in), 1/sqrt(in))
    bound = 1.0 / (D ** 0.5)
    x = jax.random.normal(kx, (B, D), dtype=jnp.float32)
    w1 = jax.random.uniform(kw1, (D, L), minval=-bound, maxval=bound, dtype=jnp.float32)
    b1 = jax.random.uniform(kb1, (1, L), minval=-bound, maxval=bound, dtype=jnp.float32)
    w2 = jax.random.uniform(kw2, (D, L), minval=-bound, maxval=bound, dtype=jnp.float32)
    b2 = jax.random.uniform(kb2, (1, L), minval=-bound, maxval=bound, dtype=jnp.float32)
    # torch.randn(mu.shape) -> deterministic normal noise generated in-script.
    # TODO(synk): eps could instead be drawn in-kernel (pltpu.prng_seed +
    # stateful_normal) to drop one (B, L) HBM read, at the cost of torch parity.
    eps = jax.random.normal(keps, (B, L), dtype=jnp.float32)

    z_ref, kl_ref = _reference(x, w1, b1, w2, b2, eps)

    # f32 matmul path: strict check against the reference.
    z, kl = variational_encoder(x, w1, b1, w2, b2, eps, tile_b=TILE_B)
    jax.block_until_ready((z, kl))
    assert z.shape == (B, L)
    assert jnp.allclose(z, z_ref, atol=1e-4, rtol=1e-4), "z mismatch (f32)"
    assert jnp.allclose(kl, kl_ref, atol=1e-2, rtol=1e-4), "kl mismatch (f32)"

    # bf16 matmul operands (v6e/v7x HBM-traffic win); epilogue stays in f32.
    z_bf, kl_bf = variational_encoder(x, w1, b1, w2, b2, eps, tile_b=TILE_B,
                                      matmul_dtype=jnp.bfloat16)
    jax.block_until_ready((z_bf, kl_bf))
    assert jnp.allclose(z_bf, z_ref, atol=0.15, rtol=0.1), "z mismatch (bf16)"
    assert jnp.allclose(kl_bf, kl_ref, rtol=0.02), "kl mismatch (bf16)"

    print("KERNEL_OK")
</pallas_src>

<mosaic_0001>
module attributes {stable_mosaic.version = 11 : i64} {
  func.func @vae_encoder_kernel(%arg0: i32, %arg1: memref<128x256xf32, #tpu.memory_space<vmem>>, %arg2: memref<256x256xf32, #tpu.memory_space<vmem>>, %arg3: memref<1x256xf32, #tpu.memory_space<vmem>>, %arg4: memref<128x128xf32, #tpu.memory_space<vmem>>, %arg5: memref<128x128xf32, #tpu.memory_space<vmem>>, %arg6: memref<1x1x128xf32, #tpu.memory_space<vmem>>) attributes {dimension_semantics = [#tpu.dimension_semantics<parallel>], iteration_bounds = array<i64: 2>, scalar_prefetch = 0 : i64, scratch_operands = 0 : i64, tpu.core_type = #tpu.core_type<tc>, window_params = [{transform_indices = @transform_0, window_bounds = array<i64: 128, 256>}, {pipeline_mode = #tpu.pipeline_mode<synchronous>, transform_indices = @transform_1, window_bounds = array<i64: 256, 256>}, {pipeline_mode = #tpu.pipeline_mode<synchronous>, transform_indices = @transform_2, window_bounds = array<i64: 1, 256>}, {transform_indices = @transform_3, window_bounds = array<i64: 128, 128>}, {transform_indices = @transform_4, window_bounds = array<i64: 128, 128>}, {transform_indices = @transform_5, window_bounds = array<i64: 1, 1, 128>}]} {
    %c0 = arith.constant 0 : index
    %c0_0 = arith.constant 0 : index
    %0 = vector.load %arg1[%c0, %c0_0] : memref<128x256xf32, #tpu.memory_space<vmem>>, vector<128x256xf32>
    %c0_1 = arith.constant 0 : index
    %c0_2 = arith.constant 0 : index
    %1 = vector.load %arg2[%c0_1, %c0_2] : memref<256x256xf32, #tpu.memory_space<vmem>>, vector<256x256xf32>
    %cst = arith.constant dense<0.000000e+00> : vector<128x256xf32>
    %2 = tpu.matmul %0, %1, %cst {dimension_numbers = #tpu.dot_dimension_numbers<[1], [0], [0], [1], [0, 0, 1, 1], [], []>} : vector<128x256xf32>, vector<256x256xf32>, vector<128x256xf32> -> vector<128x256xf32>
    %c0_3 = arith.constant 0 : index
    %c0_4 = arith.constant 0 : index
    %3 = vector.load %arg3[%c0_3, %c0_4] : memref<1x256xf32, #tpu.memory_space<vmem>>, vector<1x256xf32>
    %4 = vector.broadcast %3 : vector<1x256xf32> to vector<128x256xf32>
    %5 = arith.addf %2, %4 : vector<128x256xf32>
    %6 = vector.extract_strided_slice %5 {offsets = [0, 0], sizes = [128, 128], strides = [1, 1]} : vector<128x256xf32> to vector<128x128xf32>
    %7 = vector.extract_strided_slice %5 {offsets = [0, 128], sizes = [128, 128], strides = [1, 1]} : vector<128x256xf32> to vector<128x128xf32>
    %cst_5 = arith.constant 0.000000e+00 : f32
    %8 = vector.broadcast %cst_5 : f32 to vector<128x128xf32>
    %9 = arith.maximumf %6, %8 : vector<128x128xf32>
    %10 = math.exp %7 : vector<128x128xf32>
    %c0_6 = arith.constant 0 : index
    %c0_7 = arith.constant 0 : index
    %11 = vector.load %arg4[%c0_6, %c0_7] : memref<128x128xf32, #tpu.memory_space<vmem>>, vector<128x128xf32>
    %12 = arith.mulf %10, %11 : vector<128x128xf32>
    %13 = arith.addf %9, %12 : vector<128x128xf32>
    %c0_8 = arith.constant 0 : index
    %c0_9 = arith.constant 0 : index
    %14 = vector.load %arg5[%c0_8, %c0_9] : memref<128x128xf32, #tpu.memory_space<vmem>>, vector<128x128xf32>
    tpu.vector_store %arg5[%c0_8, %c0_9], %13 {strides = array<i32>} : memref<128x128xf32, #tpu.memory_space<vmem>>, vector<128x128xf32>,
    %15 = arith.mulf %10, %10 : vector<128x128xf32>
    %16 = arith.mulf %9, %9 : vector<128x128xf32>
    %17 = arith.addf %15, %16 : vector<128x128xf32>
    %18 = arith.subf %17, %7 : vector<128x128xf32>
    %cst_10 = arith.constant 5.000000e-01 : f32
    %19 = vector.broadcast %cst_10 : f32 to vector<128x128xf32>
    %20 = arith.subf %18, %19 : vector<128x128xf32>
    %cst_11 = arith.constant dense<0.000000e+00> : vector<128xf32>
    %21 = vector.multi_reduction <add>, %20, %cst_11 [0] : vector<128x128xf32> to vector<128xf32>
    %22 = vector.shape_cast %21 : vector<128xf32> to vector<1x1x128xf32>
    %c0_12 = arith.constant 0 : index
    %c0_13 = arith.constant 0 : index
    %c0_14 = arith.constant 0 : index
    %23 = vector.load %arg6[%c0_12, %c0_13, %c0_14] : memref<1x1x128xf32, #tpu.memory_space<vmem>>, vector<1x1x128xf32>
    tpu.vector_store %arg6[%c0_12, %c0_13, %c0_14], %22 {strides = array<i32>} : memref<1x1x128xf32, #tpu.memory_space<vmem>>, vector<1x1x128xf32>,
    return
  }
  func.func @transform_0(%arg0: i32) -> (i32, i32) {
    %c0_i32 = arith.constant 0 : i32
    %c0_i32_0 = arith.constant 0 : i32
    return %arg0, %c0_i32 : i32, i32
  }
  func.func @transform_1(%arg0: i32) -> (i32, i32) {
    %c0_i32 = arith.constant 0 : i32
    %c0_i32_0 = arith.constant 0 : i32
    %c0_i32_1 = arith.constant 0 : i32
    return %c0_i32, %c0_i32_0 : i32, i32
  }
  func.func @transform_2(%arg0: i32) -> (i32, i32) {
    %c0_i32 = arith.constant 0 : i32
    %c0_i32_0 = arith.constant 0 : i32
    %c0_i32_1 = arith.constant 0 : i32
    return %c0_i32, %c0_i32_0 : i32, i32
  }
  func.func @transform_3(%arg0: i32) -> (i32, i32) {
    %c0_i32 = arith.constant 0 : i32
    %c0_i32_0 = arith.constant 0 : i32
    return %arg0, %c0_i32 : i32, i32
  }
  func.func @transform_4(%arg0: i32) -> (i32, i32) {
    %c0_i32 = arith.constant 0 : i32
    %c0_i32_0 = arith.constant 0 : i32
    return %arg0, %c0_i32 : i32, i32
  }
  func.func @transform_5(%arg0: i32) -> (i32, i32, i32) {
    %c0_i32 = arith.constant 0 : i32
    %c0_i32_0 = arith.constant 0 : i32
    %c0_i32_1 = arith.constant 0 : i32
    return %arg0, %c0_i32, %c0_i32_0 : i32, i32, i32
  }
}

</mosaic_0001>

<llo_original>
// kernel: tpu_custom_call.1
$region0: #{tpu_custom_call.1}
  #allocation0 [shape = 'u32[]', space=smem, size = 0x4, offset = 0x4, fixed_abs, tag = 'smem constant byte address 0x4 - core index']
  #allocation1 [shape = 'u32[72,128]{1,0:T(1,128)}', space=vmem, size = 0x9000, scoped, tag = 'internal scratch']
  %s0 = inlined_call_operand.hbm [shape: f32[256,256], index: 0, kind: input, shape index: {}]
  %s1 = inlined_call_operand.hbm [shape: f32[256,256], index: 1, kind: input, shape index: {}]
  %s2 = inlined_call_operand.hbm [shape: f32[1,256], index: 2, kind: input, shape index: {}]
  %s3 = inlined_call_operand.hbm [shape: f32[256,128], index: 3, kind: input, shape index: {}]
  %s4 = inlined_call_operand.hbm [shape: f32[256,128], index: 4, kind: output, shape index: {0}]
  %s5 = inlined_call_operand.hbm [shape: f32[2,1,128], index: 5, kind: output, shape index: {1}]
  %6 = xla_tuple %s4, %s5
  %s7 = sld [smem:[#allocation0]]
  $region73: #{tpu_custom_call.1} parent=0
    _
  %s9 = ssub.s32 1, %s7
  %s10 = scalar_select 0, %s9, %s7
  $region1: #{tpu_custom_call.1} parent=0
    #allocation2 [shape = 'u8[262144]{0}', space=vmem, size = 0x40000, scoped, tag = 'input window, operand 0']
    #allocation3 [shape = 's32[2]{0}', space=sflag, size = 0x8, scoped, tag = 'scoped memory for tpu_custom_call.1']
    #allocation4 [shape = 's32[2]{0}', space=sflag, size = 0x8, scoped, tag = 'scoped memory for tpu_custom_call.1']
    #allocation5 [shape = 'u8[262144]{0}', space=vmem, size = 0x40000, scoped, tag = 'input window, operand 1, single buffered']
    #allocation6 [shape = 's32[1]{0}', space=sflag, size = 0x4, scoped, tag = 'scoped memory for tpu_custom_call.1']
    #allocation7 [shape = 'u8[1024]{0}', space=vmem, size = 0x400, scoped, tag = 'input window, operand 2, single buffered']
    #allocation8 [shape = 'u8[131072]{0}', space=vmem, size = 0x20000, scoped, tag = 'input window, operand 3']
    #allocation9 [shape = 's32[2]{0}', space=sflag, size = 0x8, scoped, tag = 'scoped memory for tpu_custom_call.1']
    #allocation10 [shape = 'u8[131072]{0}', space=vmem, size = 0x20000, scoped, tag = 'output window, operand 0']
    #allocation11 [shape = 'u8[1024]{0}', space=vmem, size = 0x400, scoped, tag = 'output window, operand 1']
    #allocation12 [shape = 's32[2]{0}', space=sflag, size = 0x8, scoped, tag = 'scoped memory for tpu_custom_call.1']
    %11 = vsyncpa [#allocation3], 0
    %s12 = scalar_lea.sflag [#allocation3], 1
    %13 = vsyncpa %s12, 0
    %14 = vsyncpa [#allocation6], 0
    %15 = vsyncpa [#allocation9], 0
    %s16 = scalar_lea.sflag [#allocation9], 1
    %17 = vsyncpa %s16, 0
    %18 = vsyncpa [#allocation4], 0
    %s19 = scalar_lea.sflag [#allocation4], 1
    %20 = vsyncpa %s19, 0
    %21 = vsyncpa [#allocation12], 0
    %s22 = scalar_lea.sflag [#allocation12], 1
    %23 = vsyncpa %s22, 0
    loop: start=0, step=1, limit=4
    $region2: #{tpu_custom_call.1} parent=1 // loop_pre_header
      _
    $region3: #{tpu_custom_call.1} parent=1 // loop_header
      %s25 = sphi 0, %s29
      %p26 = scmp.ge.s32.totalorder %s25, 4
      %s35 = sphi 0, %s37
      %s38 = sphi 0, %s35
      %s39 = sphi 0, %s38
      %s55 = sphi 0, %s39
      %s59 = sphi 0, %s59
      %s61 = sphi 0, %s59
      %s62 = sphi 0, %s61
      %s76 = sphi 0, %s62
      %s80 = sphi 0, %s80
      %s82 = sphi 0, %s80
      %s83 = sphi 0, %s82
      %s97 = sphi 0, %s83
      %s103 = sphi 0, %s105
      %s106 = sphi 0, %s103
      %s107 = sphi 0, %s106
      %s123 = sphi 0, %s107
      %s129 = sphi 0, %s131
      %s132 = sphi 0, %s129
      %s133 = sphi 0, %s132
      %s149 = sphi 0, %s133
      %s155 = sphi 0, %s157
      %s158 = sphi 0, %s155
      %s159 = sphi 0, %s158
      %s175 = sphi 0, %s159
    $region4: #{tpu_custom_call.1} parent=1 // loop_header_branch
      %28 = sbr.rel (%p26) target = $region8
    $region5: #{tpu_custom_call.1} parent=1 // loop_body
      %s30 = ssub.s32 %s25, 1
      %s31 = ssub.s32 %s25, 2
      %s32 = sadd.s32 %s25, 1
      %s33 = ssub.s32 %s25, %s32
      %p34 = scmp.eq.s32.totalorder %s33, 0
      %s36 = sadd.s32 %s35, 1
      %s37 = scalar_select %p34, %s35, %s36
      %p40 = pneg %p34
      %p41 = scmp.eq.s32.totalorder %s25, 1
      %p42 = por %p40, %p41
      %p43 = scmp.ne.s32.totalorder %s35, %s38
      %p44 = scmp.eq.s32.totalorder %s25, 0
      %p45 = por %p43, %p44
      %p46 = scmp.ne.s32.totalorder %s35, %s38
      %p47 = scmp.eq.s32.totalorder %s30, 1
      %p48 = por %p46, %p47
      %p49 = scmp.ne.s32.totalorder %s38, %s39
      %p50 = scmp.eq.s32.totalorder %s30, 0
      %p51 = por %p49, %p50
      %p52 = scmp.ne.s32.totalorder %s38, %s39
      %p53 = scmp.eq.s32.totalorder %s31, 1
      %p54 = por %p52, %p53
      %p56 = scmp.ne.s32.totalorder %s39, %s55
      %p57 = scmp.eq.s32.totalorder %s31, 0
      %p58 = por %p56, %p57
      %s60 = sadd.s32 %s59, 1
      %p63 = scmp.eq.s32.totalorder %s25, 1
      %p64 = scmp.ne.s32.totalorder %s59, %s61
      %p65 = scmp.eq.s32.totalorder %s25, 0
      %p66 = por %p64, %p65
      %p67 = scmp.ne.s32.totalorder %s59, %s61
      %p68 = scmp.eq.s32.totalorder %s30, 1
      %p69 = por %p67, %p68
      %p70 = scmp.ne.s32.totalorder %s61, %s62
      %p71 = scmp.eq.s32.totalorder %s30, 0
      %p72 = por %p70, %p71
      %p73 = scmp.ne.s32.totalorder %s61, %s62
      %p74 = scmp.eq.s32.totalorder %s31, 1
      %p75 = por %p73, %p74
      %p77 = scmp.ne.s32.totalorder %s62, %s76
      %p78 = scmp.eq.s32.totalorder %s31, 0
      %p79 = por %p77, %p78
      %s81 = sadd.s32 %s80, 1
      %p84 = scmp.eq.s32.totalorder %s25, 1
      %p85 = scmp.ne.s32.totalorder %s80, %s82
      %p86 = scmp.eq.s32.totalorder %s25, 0
      %p87 = por %p85, %p86
      %p88 = scmp.ne.s32.totalorder %s80, %s82
      %p89 = scmp.eq.s32.totalorder %s30, 1
      %p90 = por %p88, %p89
      %p91 = scmp.ne.s32.totalorder %s82, %s83
      %p92 = scmp.eq.s32.totalorder %s30, 0
      %p93 = por %p91, %p92
      %p94 = scmp.ne.s32.totalorder %s82, %s83
      %p95 = scmp.eq.s32.totalorder %s31, 1
      %p96 = por %p94, %p95
      %p98 = scmp.ne.s32.totalorder %s83, %s97
      %p99 = scmp.eq.s32.totalorder %s31, 0
      %p100 = por %p98, %p99
      %s101 = ssub.s32 %s25, %s32
      %p102 = scmp.eq.s32.totalorder %s101, 0
      %s104 = sadd.s32 %s103, 1
      %s105 = scalar_select %p102, %s103, %s104
      %p108 = pneg %p102
      %p109 = scmp.eq.s32.totalorder %s25, 1
      %p110 = por %p108, %p109
      %p111 = scmp.ne.s32.totalorder %s103, %s106
      %p112 = scmp.eq.s32.totalorder %s25, 0
      %p113 = por %p111, %p112
      %p114 = scmp.ne.s32.totalorder %s103, %s106
      %p115 = scmp.eq.s32.totalorder %s30, 1
      %p116 = por %p114, %p115
      %p117 = scmp.ne.s32.totalorder %s106, %s107
      %p118 = scmp.eq.s32.totalorder %s30, 0
      %p119 = por %p117, %p118
      %p120 = scmp.ne.s32.totalorder %s106, %s107
      %p121 = scmp.eq.s32.totalorder %s31, 1
      %p122 = por %p120, %p121
      %p124 = scmp.ne.s32.totalorder %s107, %s123
      %p125 = scmp.eq.s32.totalorder %s31, 0
      %p126 = por %p124, %p125
      %s127 = ssub.s32 %s25, %s32
      %p128 = scmp.eq.s32.totalorder %s127, 0
      %s130 = sadd.s32 %s129, 1
      %s131 = scalar_select %p128, %s129, %s130
      %p134 = pneg %p128
      %p135 = scmp.eq.s32.totalorder %s25, 1
      %p136 = por %p134, %p135
      %p137 = scmp.ne.s32.totalorder %s129, %s132
      %p138 = scmp.eq.s32.totalorder %s25, 0
      %p139 = por %p137, %p138
      %p140 = scmp.ne.s32.totalorder %s129, %s132
      %p141 = scmp.eq.s32.totalorder %s30, 1
      %p142 = por %p140, %p141
      %p143 = scmp.ne.s32.totalorder %s132, %s133
      %p144 = scmp.eq.s32.totalorder %s30, 0
      %p145 = por %p143, %p144
      %p146 = scmp.ne.s32.totalorder %s132, %s133
      %p147 = scmp.eq.s32.totalorder %s31, 1
      %p148 = por %p146, %p147
      %p150 = scmp.ne.s32.totalorder %s133, %s149
      %p151 = scmp.eq.s32.totalorder %s31, 0
      %p152 = por %p150, %p151
      %s153 = ssub.s32 %s25, %s32
      %p154 = scmp.eq.s32.totalorder %s153, 0
      %s156 = sadd.s32 %s155, 1
      %s157 = scalar_select %p154, %s155, %s156
      %p160 = pneg %p154
      %p161 = scmp.eq.s32.totalorder %s25, 1
      %p162 = por %p160, %p161
      %p163 = scmp.ne.s32.totalorder %s155, %s158
      %p164 = scmp.eq.s32.totalorder %s25, 0
      %p165 = por %p163, %p164
      %p166 = scmp.ne.s32.totalorder %s155, %s158
      %p167 = scmp.eq.s32.totalorder %s30, 1
      %p168 = por %p166, %p167
      %p169 = scmp.ne.s32.totalorder %s158, %s159
      %p170 = scmp.eq.s32.totalorder %s30, 0
      %p171 = por %p169, %p170
      %p172 = scmp.ne.s32.totalorder %s158, %s159
      %p173 = scmp.eq.s32.totalorder %s31, 1
      %p174 = por %p172, %p173
      %p176 = scmp.ne.s32.totalorder %s159, %s175
      %p177 = scmp.eq.s32.totalorder %s31, 0
      %p178 = por %p176, %p177
      %p179 = scmp.le.s32.totalorder 1, %s25
      %p180 = scmp.lt.s32.totalorder %s25, 3
      %p181 = pnand %p179, %p180
      %p182 = pneg %p181
      // Predicated region
      $region9: #{tpu_custom_call.1} parent=5 // pred_check
        _
      $region10: #{tpu_custom_call.1} parent=5 // pred_check_branch
        %184 = sbr.rel (%p181) target = $region12
      $region11: #{tpu_custom_call.1} parent=5 // pred_region
        %s185 = ssub.s32 %s25, 1
        // Predicated region
        $region13: #{tpu_custom_call.1} parent=11 // pred_check
          %p186 = pneg %p72
        $region14: #{tpu_custom_call.1} parent=11 // pred_check_branch
          %188 = sbr.rel (%p186) target = $region16
        $region15: #{tpu_custom_call.1} parent=11 // pred_region
          %190 = vsyncadd [#allocation6], 0
          %s191 = sshll.u32 %s1, 4
          %s192 = int_to_ptr.hbm [resolvable:$true] %s191
          %s193 = sshll.u32 [#allocation5], 4
          %s194 = int_to_ptr.vmem [resolvable:$true] %s193
          %199 = dma.hbm_to_vmem [thread:$0]  %s192, 8192, %s194, [#allocation6], 256, 256, 16
        $region16: #{tpu_custom_call.1} parent=11 // pred_fallthru
          _
        // Predicated region
        $region17: #{tpu_custom_call.1} parent=11 // pred_check
          %p200 = pneg %p93
        $region18: #{tpu_custom_call.1} parent=11 // pred_check_branch
          %202 = sbr.rel (%p200) target = $region20
        $region19: #{tpu_custom_call.1} parent=11 // pred_region
          %204 = vsyncadd [#allocation6], 0
          %s206 = sshll.u32 %s2, 4
          %s207 = int_to_ptr.hbm [resolvable:$true] %s206
          %s208 = sshll.u32 [#allocation7], 4
          %s209 = int_to_ptr.vmem [resolvable:$true] %s208
          %211 = dma.hbm_to_vmem [thread:$0]  %s207, 32, %s209, [#allocation6]
        $region20: #{tpu_custom_call.1} parent=11 // pred_fallthru
          _
      $region12: #{tpu_custom_call.1} parent=5 // pred_fallthru
        _
      %p212 = scmp.lt.s32.totalorder %s25, 2
      // Predicated region
      $region21: #{tpu_custom_call.1} parent=5 // pred_check
        %p213 = pneg %p212
      $region22: #{tpu_custom_call.1} parent=5 // pred_check_branch
        %215 = sbr.rel (%p213) target = $region24
      $region23: #{tpu_custom_call.1} parent=5 // pred_region
        // Predicated region
        $region25: #{tpu_custom_call.1} parent=23 // pred_check
          %p216 = pneg %p45
        $region26: #{tpu_custom_call.1} parent=23 // pred_check_branch
          %218 = sbr.rel (%p216) target = $region28
        $region27: #{tpu_custom_call.1} parent=23 // pred_region
          %s219 = sand.u32 %s35, 1
          %s220 = scalar_lea.sflag [#allocation3], %s219
          %s221 = sand.u32 %s35, 1
          %s222 = smul.addr %s221, 256
          %s223 = scalar_lea.vmem [#allocation2], %s222
          %s224 = smul.u32 16, %s25
          %226 = vsyncadd %s220, 0
          %s227 = smul.addr %s224, 2
          %s228 = smul.addr %s227, 8
          %s229 = scalar_lea.hbm %s0, %s228
          %s230 = sshll.u32 %s229, 4
          %s231 = int_to_ptr.hbm [resolvable:$true] %s230
          %s232 = sshll.u32 %s223, 4
          %s233 = int_to_ptr.vmem [resolvable:$true] %s232
          %238 = dma.hbm_to_vmem [thread:$0]  %s231, 4096, %s233, %s220, 256, 256, 16
        $region28: #{tpu_custom_call.1} parent=23 // pred_fallthru
          _
        // Predicated region
        $region29: #{tpu_custom_call.1} parent=23 // pred_check
          %p239 = pneg %p113
        $region30: #{tpu_custom_call.1} parent=23 // pred_check_branch
          %241 = sbr.rel (%p239) target = $region32
        $region31: #{tpu_custom_call.1} parent=23 // pred_region
          %s242 = sand.u32 %s103, 1
          %s243 = scalar_lea.sflag [#allocation9], %s242
          %s244 = sand.u32 %s103, 1
          %s245 = smul.addr %s244, 128
          %s246 = scalar_lea.vmem [#allocation8], %s245
          %s247 = smul.u32 16, %s25
          %249 = vsyncadd %s243, 0
          %s250 = smul.addr %s247, 8
          %s251 = scalar_lea.hbm %s3, %s250
          %s252 = sshll.u32 %s251, 4
          %s253 = int_to_ptr.hbm [resolvable:$true] %s252
          %s254 = sshll.u32 %s246, 4
          %s255 = int_to_ptr.vmem [resolvable:$true] %s254
          %260 = dma.hbm_to_vmem [thread:$0]  %s253, 2048, %s255, %s243, 128, 128, 8
        $region32: #{tpu_custom_call.1} parent=23 // pred_fallthru
          _
      $region24: #{tpu_custom_call.1} parent=5 // pred_fallthru
        _
      %p261 = scmp.le.s32.totalorder 1, %s25
      %p262 = scmp.lt.s32.totalorder %s25, 3
      %p263 = pnand %p261, %p262
      %p264 = pneg %p263
      // Predicated region
      $region33: #{tpu_custom_call.1} parent=5 // pred_check
        _
      $region34: #{tpu_custom_call.1} parent=5 // pred_check_branch
        %266 = sbr.rel (%p263) target = $region36
      $region35: #{tpu_custom_call.1} parent=5 // pred_region
        %s267 = ssub.s32 %s25, 1
        %s268 = sand.u32 %s38, 1
        %s269 = scalar_lea.sflag [#allocation3], %s268
        %s270 = sand.u32 %s38, 1
        %s271 = smul.addr %s270, 256
        %s272 = scalar_lea.vmem [#allocation2], %s271
        // Predicated region
        $region37: #{tpu_custom_call.1} parent=35 // pred_check
          %p273 = pneg %p51
        $region38: #{tpu_custom_call.1} parent=35 // pred_check_branch
          %275 = sbr.rel (%p273) target = $region40
        $region39: #{tpu_custom_call.1} parent=35 // pred_region
          %277 = dma.done %s269, 4096
        $region40: #{tpu_custom_call.1} parent=35 // pred_fallthru
          _
        // Predicated region
        $region41: #{tpu_custom_call.1} parent=35 // pred_check
          %p278 = pneg %p72
        $region42: #{tpu_custom_call.1} parent=35 // pred_check_branch
          %280 = sbr.rel (%p278) target = $region44
        $region43: #{tpu_custom_call.1} parent=35 // pred_region
          %282 = dma.done [#allocation6], 8192
        $region44: #{tpu_custom_call.1} parent=35 // pred_fallthru
          _
        // Predicated region
        $region45: #{tpu_custom_call.1} parent=35 // pred_check
          %p283 = pneg %p93
        $region46: #{tpu_custom_call.1} parent=35 // pred_check_branch
          %285 = sbr.rel (%p283) target = $region48
        $region47: #{tpu_custom_call.1} parent=35 // pred_region
          %287 = dma.done [#allocation6], 32
        $region48: #{tpu_custom_call.1} parent=35 // pred_fallthru
          _
        %s288 = sand.u32 %s106, 1
        %s289 = scalar_lea.sflag [#allocation9], %s288
        %s290 = sand.u32 %s106, 1
        %s291 = smul.addr %s290, 128
        %s292 = scalar_lea.vmem [#allocation8], %s291
        // Predicated region
        $region49: #{tpu_custom_call.1} parent=35 // pred_check
          %p293 = pneg %p119
        $region50: #{tpu_custom_call.1} parent=35 // pred_check_branch
          %295 = sbr.rel (%p293) target = $region52
        $region51: #{tpu_custom_call.1} parent=35 // pred_region
          %297 = dma.done %s289, 2048
        $region52: #{tpu_custom_call.1} parent=35 // pred_fallthru
          _
        %s298 = sand.u32 %s38, 1
        %s299 = scalar_lea.sflag [#allocation3], %s298
        %s300 = sand.u32 %s38, 1
        %s301 = smul.addr %s300, 256
        %s302 = scalar_lea.vmem [#allocation2], %s301
        %p303 = pneg %p51
        %p304 = pneg %p48
        %p305 = pneg %p72
        %p306 = pneg %p69
        %p307 = pneg %p93
        %p308 = pneg %p90
        %s309 = sand.u32 %s106, 1
        %s310 = scalar_lea.sflag [#allocation9], %s309
        %s311 = sand.u32 %s106, 1
        %s312 = smul.addr %s311, 128
        %s313 = scalar_lea.vmem [#allocation8], %s312
        %p314 = pneg %p119
        %p315 = pneg %p116
        %p316 = pneg %p145
        %p317 = pneg %p142
        %s318 = sand.u32 %s132, 1
        %s319 = scalar_lea.sflag [#allocation4], %s318
        %s320 = sand.u32 %s132, 1
        %s321 = smul.addr %s320, 128
        %s322 = scalar_lea.vmem [#allocation10], %s321
        %p323 = pneg %p171
        %p324 = pneg %p168
        %s325 = sand.u32 %s158, 1
        %s326 = scalar_lea.sflag [#allocation12], %s325
        %s327 = sand.u32 %s158, 1
        %s328 = scalar_lea.vmem [#allocation11], %s327
        %s329 = smul.u32 16, %s30
        %s330 = smul.u32 16, %s30
        %s331 = smul.u32 16, %s30
        %v332 = vld [vmem:[%s272] sm:$0xff]
        %v333 = vld [vmem:[%s272 + $0x8] sm:$0xff]
        %v334 = vld [vmem:[%s272 + $0x10] sm:$0xff]
        %v335 = vld [vmem:[%s272 + $0x18] sm:$0xff]
        %v336 = vld [vmem:[%s272 + $0x20] sm:$0xff]
        %v337 = vld [vmem:[%s272 + $0x28] sm:$0xff]
        %v338 = vld [vmem:[%s272 + $0x30] sm:$0xff]
        %v339 = vld [vmem:[%s272 + $0x38] sm:$0xff]
        %v340 = vld [vmem:[%s272 + $0x40] sm:$0xff]
        %v341 = vld [vmem:[%s272 + $0x48] sm:$0xff]
        %v342 = vld [vmem:[%s272 + $0x50] sm:$0xff]
        %v343 = vld [vmem:[%s272 + $0x58] sm:$0xff]
        %v344 = vld [vmem:[%s272 + $0x60] sm:$0xff]
        %v345 = vld [vmem:[%s272 + $0x68] sm:$0xff]
        %v346 = vld [vmem:[%s272 + $0x70] sm:$0xff]
        %v347 = vld [vmem:[%s272 + $0x78] sm:$0xff]
        %v348 = vld [vmem:[%s272 + $0x80] sm:$0xff]
        %v349 = vld [vmem:[%s272 + $0x88] sm:$0xff]
        %v350 = vld [vmem:[%s272 + $0x90] sm:$0xff]
        %v351 = vld [vmem:[%s272 + $0x98] sm:$0xff]
        %v352 = vld [vmem:[%s272 + $0xa0] sm:$0xff]
        %v353 = vld [vmem:[%s272 + $0xa8] sm:$0xff]
        %v354 = vld [vmem:[%s272 + $0xb0] sm:$0xff]
        %v355 = vld [vmem:[%s272 + $0xb8] sm:$0xff]
        %v356 = vld [vmem:[%s272 + $0xc0] sm:$0xff]
        %v357 = vld [vmem:[%s272 + $0xc8] sm:$0xff]
        %v358 = vld [vmem:[%s272 + $0xd0] sm:$0xff]
        %v359 = vld [vmem:[%s272 + $0xd8] sm:$0xff]
        %v360 = vld [vmem:[%s272 + $0xe0] sm:$0xff]
        %v361 = vld [vmem:[%s272 + $0xe8] sm:$0xff]
        %v362 = vld [vmem:[%s272 + $0xf0] sm:$0xff]
        %v363 = vld [vmem:[%s272 + $0xf8] sm:$0xff]
        %v364 = vld [vmem:[#allocation5] sm:$0xff]
        %v365 = vld [vmem:[#allocation5 + $0x8] sm:$0xff]
        %v366 = vld [vmem:[#allocation5 + $0x10] sm:$0xff]
        %v367 = vld [vmem:[#allocation5 + $0x18] sm:$0xff]
        %v368 = vld [vmem:[#allocation5 + $0x20] sm:$0xff]
        %v369 = vld [vmem:[#allocation5 + $0x28] sm:$0xff]
        %v370 = vld [vmem:[#allocation5 + $0x30] sm:$0xff]
        %v371 = vld [vmem:[#allocation5 + $0x38] sm:$0xff]
        %v372 = vld [vmem:[#allocation5 + $0x40] sm:$0xff]
        %v373 = vld [vmem:[#allocation5 + $0x48] sm:$0xff]
        %v374 = vld [vmem:[#allocation5 + $0x50] sm:$0xff]
        %v375 = vld [vmem:[#allocation5 + $0x58] sm:$0xff]
        %v376 = vld [vmem:[#allocation5 + $0x60] sm:$0xff]
        %v377 = vld [vmem:[#allocation5 + $0x68] sm:$0xff]
        %v378 = vld [vmem:[#allocation5 + $0x70] sm:$0xff]
        %v379 = vld [vmem:[#allocation5 + $0x78] sm:$0xff]
        %v380 = vld [vmem:[#allocation5 + $0x80] sm:$0xff]
        %v381 = vld [vmem:[#allocation5 + $0x88] sm:$0xff]
        %v382 = vld [vmem:[#allocation5 + $0x90] sm:$0xff]
        %v383 = vld [vmem:[#allocation5 + $0x98] sm:$0xff]
        %v384 = vld [vmem:[#allocation5 + $0xa0] sm:$0xff]
        %v385 = vld [vmem:[#allocation5 + $0xa8] sm:$0xff]
        %v386 = vld [vmem:[#allocation5 + $0xb0] sm:$0xff]
        %v387 = vld [vmem:[#allocation5 + $0xb8] sm:$0xff]
        %v388 = vld [vmem:[#allocation5 + $0xc0] sm:$0xff]
        %v389 = vld [vmem:[#allocation5 + $0xc8] sm:$0xff]
        %v390 = vld [vmem:[#allocation5 + $0xd0] sm:$0xff]
        %v391 = vld [vmem:[#allocation5 + $0xd8] sm:$0xff]
        %v392 = vld [vmem:[#allocation5 + $0xe0] sm:$0xff]
        %v393 = vld [vmem:[#allocation5 + $0xe8] sm:$0xff]
        %v394 = vld [vmem:[#allocation5 + $0xf0] sm:$0xff]
        %v395 = vld [vmem:[#allocation5 + $0xf8] sm:$0xff]
        %v396 = vld [vmem:[#allocation5 + $0x100] sm:$0xff]
        %v397 = vld [vmem:[#allocation5 + $0x108] sm:$0xff]
        %v398 = vld [vmem:[#allocation5 + $0x110] sm:$0xff]
        %v399 = vld [vmem:[#allocation5 + $0x118] sm:$0xff]
        %v400 = vld [vmem:[#allocation5 + $0x120] sm:$0xff]
        %v401 = vld [vmem:[#allocation5 + $0x128] sm:$0xff]
        %v402 = vld [vmem:[#allocation5 + $0x130] sm:$0xff]
        %v403 = vld [vmem:[#allocation5 + $0x138] sm:$0xff]
        %v404 = vld [vmem:[#allocation5 + $0x140] sm:$0xff]
        %v405 = vld [vmem:[#allocation5 + $0x148] sm:$0xff]
        %v406 = vld [vmem:[#allocation5 + $0x150] sm:$0xff]
        %v407 = vld [vmem:[#allocation5 + $0x158] sm:$0xff]
        %v408 = vld [vmem:[#allocation5 + $0x160] sm:$0xff]
        %v409 = vld [vmem:[#allocation5 + $0x168] sm:$0xff]
        %v410 = vld [vmem:[#allocation5 + $0x170] sm:$0xff]
        %v411 = vld [vmem:[#allocation5 + $0x178] sm:$0xff]
        %v412 = vld [vmem:[#allocation5 + $0x180] sm:$0xff]
        %v413 = vld [vmem:[#allocation5 + $0x188] sm:$0xff]
        %v414 = vld [vmem:[#allocation5 + $0x190] sm:$0xff]
        %v415 = vld [vmem:[#allocation5 + $0x198] sm:$0xff]
        %v416 = vld [vmem:[#allocation5 + $0x1a0] sm:$0xff]
        %v417 = vld [vmem:[#allocation5 + $0x1a8] sm:$0xff]
        %v418 = vld [vmem:[#allocation5 + $0x1b0] sm:$0xff]
        %v419 = vld [vmem:[#allocation5 + $0x1b8] sm:$0xff]
        %v420 = vld [vmem:[#allocation5 + $0x1c0] sm:$0xff]
        %v421 = vld [vmem:[#allocation5 + $0x1c8] sm:$0xff]
        %v422 = vld [vmem:[#allocation5 + $0x1d0] sm:$0xff]
        %v423 = vld [vmem:[#allocation5 + $0x1d8] sm:$0xff]
        %v424 = vld [vmem:[#allocation5 + $0x1e0] sm:$0xff]
        %v425 = vld [vmem:[#allocation5 + $0x1e8] sm:$0xff]
        %v426 = vld [vmem:[#allocation5 + $0x1f0] sm:$0xff]
        %v427 = vld [vmem:[#allocation5 + $0x1f8] sm:$0xff]
        %v428 = vld [vmem:[#allocation7] sm:$0x3]
        %v430 = vperm.slane %v428, 0
        %v431 = vperm.slane %v428, 1
        %434 = vmatpush.msra.mxu0 %v394
        %435 = vmatpush.msra.mxu0 %v392
        %436 = vmatpush.msra.mxu0 %v390
        %437 = vmatpush.msra.mxu0 %v388
        %438 = vmatpush.msra.mxu0 %v386
        %439 = vmatpush.msra.mxu0 %v384
        %440 = vmatpush.msra.mxu0 %v382
        %441 = vmatpush.msra.mxu0 %v380
        %442 = vmatpush.msra.mxu0 %v378
        %443 = vmatpush.msra.mxu0 %v376
        %444 = vmatpush.msra.mxu0 %v374
        %445 = vmatpush.msra.mxu0 %v372
        %446 = vmatpush.msra.mxu0 %v370
        %447 = vmatpush.msra.mxu0 %v368
        %448 = vmatpush.msra.mxu0 %v366
        %449 = vmatpush.msra.mxu0 %v364
        %450 = vmatmul.f32.gmra.mxu0 %v332
        %v451 = vpop.f32.mrf.mxu0
        %v452 = vadd.f32 %v430, %v451
        %453 = vmatmul.f32.gmra.mxu0 %v334
        %v454 = vpop.f32.mrf.mxu0
        %v455 = vadd.f32 %v430, %v454
        %456 = vmatmul.f32.gmra.mxu0 %v336
        %v457 = vpop.f32.mrf.mxu0
        %v458 = vadd.f32 %v430, %v457
        %459 = vmatmul.f32.gmra.mxu0 %v338
        %v460 = vpop.f32.mrf.mxu0
        %v461 = vadd.f32 %v430, %v460
        %462 = vmatmul.f32.gmra.mxu0 %v340
        %v463 = vpop.f32.mrf.mxu0
        %v464 = vadd.f32 %v430, %v463
        %465 = vmatmul.f32.gmra.mxu0 %v342
        %v466 = vpop.f32.mrf.mxu0
        %v467 = vadd.f32 %v430, %v466
        %468 = vmatmul.f32.gmra.mxu0 %v344
        %v469 = vpop.f32.mrf.mxu0
        %v470 = vadd.f32 %v430, %v469
        %471 = vmatmul.f32.gmra.mxu0 %v346
        %v472 = vpop.f32.mrf.mxu0
        %v473 = vadd.f32 %v430, %v472
        %474 = vmatmul.f32.gmra.mxu0 %v348
        %v475 = vpop.f32.mrf.mxu0
        %v476 = vadd.f32 %v430, %v475
        %477 = vmatmul.f32.gmra.mxu0 %v350
        %v478 = vpop.f32.mrf.mxu0
        %v479 = vadd.f32 %v430, %v478
        %480 = vmatmul.f32.gmra.mxu0 %v352
        %v481 = vpop.f32.mrf.mxu0
        %v482 = vadd.f32 %v430, %v481
        %483 = vmatmul.f32.gmra.mxu0 %v354
        %v484 = vpop.f32.mrf.mxu0
        %v485 = vadd.f32 %v430, %v484
        %486 = vmatmul.f32.gmra.mxu0 %v356
        %v487 = vpop.f32.mrf.mxu0
        %v488 = vadd.f32 %v430, %v487
        %489 = vmatmul.f32.gmra.mxu0 %v358
        %v490 = vpop.f32.mrf.mxu0
        %v491 = vadd.f32 %v430, %v490
        %492 = vmatmul.f32.gmra.mxu0 %v360
        %v493 = vpop.f32.mrf.mxu0
        %v494 = vadd.f32 %v430, %v493
        %495 = vmatmul.f32.gmra.mxu0 %v362
        %v496 = vpop.f32.mrf.mxu0
        %v497 = vadd.f32 %v430, %v496
        %498 = vdwg.mxu0
        %499 = vmatpush.msra.mxu0 %v426
        %500 = vmatpush.msra.mxu0 %v424
        %501 = vmatpush.msra.mxu0 %v422
        %502 = vmatpush.msra.mxu0 %v420
        %503 = vmatpush.msra.mxu0 %v418
        %504 = vmatpush.msra.mxu0 %v416
        %505 = vmatpush.msra.mxu0 %v414
        %506 = vmatpush.msra.mxu0 %v412
        %507 = vmatpush.msra.mxu0 %v410
        %508 = vmatpush.msra.mxu0 %v408
        %509 = vmatpush.msra.mxu0 %v406
        %510 = vmatpush.msra.mxu0 %v404
        %511 = vmatpush.msra.mxu0 %v402
        %512 = vmatpush.msra.mxu0 %v400
        %513 = vmatpush.msra.mxu0 %v398
        %514 = vmatpush.msra.mxu0 %v396
        %515 = vmatmul.f32.gmra.mxu0 %v333
        %v516 = vpop.f32.mrf.mxu0
        %v517 = vadd.f32 %v452, %v516
        %518 = vmatmul.f32.gmra.mxu0 %v335
        %v519 = vpop.f32.mrf.mxu0
        %v520 = vadd.f32 %v455, %v519
        %521 = vmatmul.f32.gmra.mxu0 %v337
        %v522 = vpop.f32.mrf.mxu0
        %v523 = vadd.f32 %v458, %v522
        %524 = vmatmul.f32.gmra.mxu0 %v339
        %v525 = vpop.f32.mrf.mxu0
        %v526 = vadd.f32 %v461, %v525
        %527 = vmatmul.f32.gmra.mxu0 %v341
        %v528 = vpop.f32.mrf.mxu0
        %v529 = vadd.f32 %v464, %v528
        %530 = vmatmul.f32.gmra.mxu0 %v343
        %v531 = vpop.f32.mrf.mxu0
        %v532 = vadd.f32 %v467, %v531
        %533 = vmatmul.f32.gmra.mxu0 %v345
        %v534 = vpop.f32.mrf.mxu0
        %v535 = vadd.f32 %v470, %v534
        %536 = vmatmul.f32.gmra.mxu0 %v347
        %v537 = vpop.f32.mrf.mxu0
        %v538 = vadd.f32 %v473, %v537
        %539 = vmatmul.f32.gmra.mxu0 %v349
        %v540 = vpop.f32.mrf.mxu0
        %v541 = vadd.f32 %v476, %v540
        %542 = vmatmul.f32.gmra.mxu0 %v351
        %v543 = vpop.f32.mrf.mxu0
        %v544 = vadd.f32 %v479, %v543
        %545 = vmatmul.f32.gmra.mxu0 %v353
        %v546 = vpop.f32.mrf.mxu0
        %v547 = vadd.f32 %v482, %v546
        %548 = vmatmul.f32.gmra.mxu0 %v355
        %v549 = vpop.f32.mrf.mxu0
        %v550 = vadd.f32 %v485, %v549
        %551 = vmatmul.f32.gmra.mxu0 %v357
        %v552 = vpop.f32.mrf.mxu0
        %v553 = vadd.f32 %v488, %v552
        %554 = vmatmul.f32.gmra.mxu0 %v359
        %v555 = vpop.f32.mrf.mxu0
        %v556 = vadd.f32 %v491, %v555
        %557 = vmatmul.f32.gmra.mxu0 %v361
        %v558 = vpop.f32.mrf.mxu0
        %v559 = vadd.f32 %v494, %v558
        %560 = vmatmul.f32.gmra.mxu0 %v363
        %v561 = vpop.f32.mrf.mxu0
        %v562 = vadd.f32 %v497, %v561
        %563 = vdwg.mxu0
        %564 = vmatpush.msra.mxu0 %v395
        %565 = vmatpush.msra.mxu0 %v393
        %566 = vmatpush.msra.mxu0 %v391
        %567 = vmatpush.msra.mxu0 %v389
        %568 = vmatpush.msra.mxu0 %v387
        %569 = vmatpush.msra.mxu0 %v385
        %570 = vmatpush.msra.mxu0 %v383
        %571 = vmatpush.msra.mxu0 %v381
        %572 = vmatpush.msra.mxu0 %v379
        %573 = vmatpush.msra.mxu0 %v377
        %574 = vmatpush.msra.mxu0 %v375
        %575 = vmatpush.msra.mxu0 %v373
        %576 = vmatpush.msra.mxu0 %v371
        %577 = vmatpush.msra.mxu0 %v369
        %578 = vmatpush.msra.mxu0 %v367
        %579 = vmatpush.msra.mxu0 %v365
        %580 = vmatmul.f32.gmra.mxu0 %v332
        %v581 = vpop.f32.mrf.mxu0
        %v582 = vadd.f32 %v431, %v581
        %583 = vmatmul.f32.gmra.mxu0 %v334
        %v584 = vpop.f32.mrf.mxu0
        %v585 = vadd.f32 %v431, %v584
        %586 = vmatmul.f32.gmra.mxu0 %v336
        %v587 = vpop.f32.mrf.mxu0
        %v588 = vadd.f32 %v431, %v587
        %589 = vmatmul.f32.gmra.mxu0 %v338
        %v590 = vpop.f32.mrf.mxu0
        %v591 = vadd.f32 %v431, %v590
        %592 = vmatmul.f32.gmra.mxu0 %v340
        %v593 = vpop.f32.mrf.mxu0
        %v594 = vadd.f32 %v431, %v593
        %595 = vmatmul.f32.gmra.mxu0 %v342
        %v596 = vpop.f32.mrf.mxu0
        %v597 = vadd.f32 %v431, %v596
        %598 = vmatmul.f32.gmra.mxu0 %v344
        %v599 = vpop.f32.mrf.mxu0
        %v600 = vadd.f32 %v431, %v599
        %601 = vmatmul.f32.gmra.mxu0 %v346
        %v602 = vpop.f32.mrf.mxu0
        %v603 = vadd.f32 %v431, %v602
        %604 = vmatmul.f32.gmra.mxu0 %v348
        %v605 = vpop.f32.mrf.mxu0
        %v606 = vadd.f32 %v431, %v605
        %607 = vmatmul.f32.gmra.mxu0 %v350
        %v608 = vpop.f32.mrf.mxu0
        %v609 = vadd.f32 %v431, %v608
        %610 = vmatmul.f32.gmra.mxu0 %v352
        %v611 = vpop.f32.mrf.mxu0
        %v612 = vadd.f32 %v431, %v611
        %613 = vmatmul.f32.gmra.mxu0 %v354
        %v614 = vpop.f32.mrf.mxu0
        %v615 = vadd.f32 %v431, %v614
        %616 = vmatmul.f32.gmra.mxu0 %v356
        %v617 = vpop.f32.mrf.mxu0
        %v618 = vadd.f32 %v431, %v617
        %619 = vmatmul.f32.gmra.mxu0 %v358
        %v620 = vpop.f32.mrf.mxu0
        %v621 = vadd.f32 %v431, %v620
        %622 = vmatmul.f32.gmra.mxu0 %v360
        %v623 = vpop.f32.mrf.mxu0
        %v624 = vadd.f32 %v431, %v623
        %625 = vmatmul.f32.gmra.mxu0 %v362
        %v626 = vpop.f32.mrf.mxu0
        %v627 = vadd.f32 %v431, %v626
        %628 = vdwg.mxu0
        %629 = vmatpush.msra.mxu0 %v427
        %630 = vmatpush.msra.mxu0 %v425
        %631 = vmatpush.msra.mxu0 %v423
        %632 = vmatpush.msra.mxu0 %v421
        %633 = vmatpush.msra.mxu0 %v419
        %634 = vmatpush.msra.mxu0 %v417
        %635 = vmatpush.msra.mxu0 %v415
        %636 = vmatpush.msra.mxu0 %v413
        %637 = vmatpush.msra.mxu0 %v411
        %638 = vmatpush.msra.mxu0 %v409
        %639 = vmatpush.msra.mxu0 %v407
        %640 = vmatpush.msra.mxu0 %v405
        %641 = vmatpush.msra.mxu0 %v403
        %642 = vmatpush.msra.mxu0 %v401
        %643 = vmatpush.msra.mxu0 %v399
        %644 = vmatpush.msra.mxu0 %v397
        %645 = vmatmul.f32.gmra.mxu0 %v333
        %v646 = vpop.f32.mrf.mxu0
        %v647 = vadd.f32 %v582, %v646
        %648 = vmatmul.f32.gmra.mxu0 %v335
        %v649 = vpop.f32.mrf.mxu0
        %v650 = vadd.f32 %v585, %v649
        %651 = vmatmul.f32.gmra.mxu0 %v337
        %v652 = vpop.f32.mrf.mxu0
        %v653 = vadd.f32 %v588, %v652
        %654 = vmatmul.f32.gmra.mxu0 %v339
        %v655 = vpop.f32.mrf.mxu0
        %v656 = vadd.f32 %v591, %v655
        %657 = vmatmul.f32.gmra.mxu0 %v341
        %v658 = vpop.f32.mrf.mxu0
        %v659 = vadd.f32 %v594, %v658
        %660 = vmatmul.f32.gmra.mxu0 %v343
        %v661 = vpop.f32.mrf.mxu0
        %v662 = vadd.f32 %v597, %v661
        %663 = vmatmul.f32.gmra.mxu0 %v345
        %v664 = vpop.f32.mrf.mxu0
        %v665 = vadd.f32 %v600, %v664
        %666 = vmatmul.f32.gmra.mxu0 %v347
        %v667 = vpop.f32.mrf.mxu0
        %v668 = vadd.f32 %v603, %v667
        %669 = vmatmul.f32.gmra.mxu0 %v349
        %v670 = vpop.f32.mrf.mxu0
        %v671 = vadd.f32 %v606, %v670
        %672 = vmatmul.f32.gmra.mxu0 %v351
        %v673 = vpop.f32.mrf.mxu0
        %v674 = vadd.f32 %v609, %v673
        %675 = vmatmul.f32.gmra.mxu0 %v353
        %v676 = vpop.f32.mrf.mxu0
        %v677 = vadd.f32 %v612, %v676
        %678 = vmatmul.f32.gmra.mxu0 %v355
        %v679 = vpop.f32.mrf.mxu0
        %v680 = vadd.f32 %v615, %v679
        %681 = vmatmul.f32.gmra.mxu0 %v357
        %v682 = vpop.f32.mrf.mxu0
        %v683 = vadd.f32 %v618, %v682
        %684 = vmatmul.f32.gmra.mxu0 %v359
        %v685 = vpop.f32.mrf.mxu0
        %v686 = vadd.f32 %v621, %v685
        %687 = vmatmul.f32.gmra.mxu0 %v361
        %v688 = vpop.f32.mrf.mxu0
        %v689 = vadd.f32 %v624, %v688
        %690 = vmatmul.f32.gmra.mxu0 %v363
        %v691 = vpop.f32.mrf.mxu0
        %v692 = vadd.f32 %v627, %v691
        %693 = vdwg.mxu0
        %v694 = vmax.f32 %v517, 0.0
        %v695 = vmax.f32 %v520, 0.0
        %v696 = vmax.f32 %v523, 0.0
        %v697 = vmax.f32 %v526, 0.0
        %v698 = vmax.f32 %v529, 0.0
        %v699 = vmax.f32 %v532, 0.0
        %v700 = vmax.f32 %v535, 0.0
        %v701 = vmax.f32 %v538, 0.0
        %v702 = vmax.f32 %v541, 0.0
        %v703 = vmax.f32 %v544, 0.0
        %v704 = vmax.f32 %v547, 0.0
        %v705 = vmax.f32 %v550, 0.0
        %v706 = vmax.f32 %v553, 0.0
        %v707 = vmax.f32 %v556, 0.0
        %v708 = vmax.f32 %v559, 0.0
        %v709 = vmax.f32 %v562, 0.0
        %v710 = vmul.f32 %v647, 1.442695
        %v711 = vpow.pop %v710
        %v712 = vmul.f32 %v650, 1.442695
        %v713 = vpow.pop %v712
        %v714 = vmul.f32 %v653, 1.442695
        %v715 = vpow.pop %v714
        %v716 = vmul.f32 %v656, 1.442695
        %v717 = vpow.pop %v716
        %v718 = vmul.f32 %v659, 1.442695
        %v719 = vpow.pop %v718
        %v720 = vmul.f32 %v662, 1.442695
        %v721 = vpow.pop %v720
        %v722 = vmul.f32 %v665, 1.442695
        %v723 = vpow.pop %v722
        %v724 = vmul.f32 %v668, 1.442695
        %v725 = vpow.pop %v724
        %v726 = vmul.f32 %v671, 1.442695
        %v727 = vpow.pop %v726
        %v728 = vmul.f32 %v674, 1.442695
        %v729 = vpow.pop %v728
        %v730 = vmul.f32 %v677, 1.442695
        %v731 = vpow.pop %v730
        %v732 = vmul.f32 %v680, 1.442695
        %v733 = vpow.pop %v732
        %v734 = vmul.f32 %v683, 1.442695
        %v735 = vpow.pop %v734
        %v736 = vmul.f32 %v686, 1.442695
        %v737 = vpow.pop %v736
        %v738 = vmul.f32 %v689, 1.442695
        %v739 = vpow.pop %v738
        %v740 = vmul.f32 %v692, 1.442695
        %v741 = vpow.pop %v740
        %v742 = vld [vmem:[%s292] sm:$0xff]
        %v743 = vld [vmem:[%s292 + $0x8] sm:$0xff]
        %v744 = vld [vmem:[%s292 + $0x10] sm:$0xff]
        %v745 = vld [vmem:[%s292 + $0x18] sm:$0xff]
        %v746 = vld [vmem:[%s292 + $0x20] sm:$0xff]
        %v747 = vld [vmem:[%s292 + $0x28] sm:$0xff]
        %v748 = vld [vmem:[%s292 + $0x30] sm:$0xff]
        %v749 = vld [vmem:[%s292 + $0x38] sm:$0xff]
        %v750 = vld [vmem:[%s292 + $0x40] sm:$0xff]
        %v751 = vld [vmem:[%s292 + $0x48] sm:$0xff]
        %v752 = vld [vmem:[%s292 + $0x50] sm:$0xff]
        %v753 = vld [vmem:[%s292 + $0x58] sm:$0xff]
        %v754 = vld [vmem:[%s292 + $0x60] sm:$0xff]
        %v755 = vld [vmem:[%s292 + $0x68] sm:$0xff]
        %v756 = vld [vmem:[%s292 + $0x70] sm:$0xff]
        %v757 = vld [vmem:[%s292 + $0x78] sm:$0xff]
        %v758 = vmul.f32 %v711, %v742
        %v759 = vmul.f32 %v713, %v743
        %v760 = vmul.f32 %v715, %v744
        %v761 = vmul.f32 %v717, %v745
        %v762 = vmul.f32 %v719, %v746
        %v763 = vmul.f32 %v721, %v747
        %v764 = vmul.f32 %v723, %v748
        %v765 = vmul.f32 %v725, %v749
        %v766 = vmul.f32 %v727, %v750
        %v767 = vmul.f32 %v729, %v751
        %v768 = vmul.f32 %v731, %v752
        %v769 = vmul.f32 %v733, %v753
        %v770 = vmul.f32 %v735, %v754
        %v771 = vmul.f32 %v737, %v755
        %v772 = vmul.f32 %v739, %v756
        %v773 = vmul.f32 %v741, %v757
        %v774 = vadd.f32 %v694, %v758
        %v775 = vadd.f32 %v695, %v759
        %v776 = vadd.f32 %v696, %v760
        %v777 = vadd.f32 %v697, %v761
        %v778 = vadd.f32 %v698, %v762
        %v779 = vadd.f32 %v699, %v763
        %v780 = vadd.f32 %v700, %v764
        %v781 = vadd.f32 %v701, %v765
        %v782 = vadd.f32 %v702, %v766
        %v783 = vadd.f32 %v703, %v767
        %v784 = vadd.f32 %v704, %v768
        %v785 = vadd.f32 %v705, %v769
        %v786 = vadd.f32 %v706, %v770
        %v787 = vadd.f32 %v707, %v771
        %v788 = vadd.f32 %v708, %v772
        %v789 = vadd.f32 %v709, %v773
        %790 = vst [vmem:[%s322] sm:$0xff] %v774
        %791 = vst [vmem:[%s322 + $0x8] sm:$0xff] %v775
        %792 = vst [vmem:[%s322 + $0x10] sm:$0xff] %v776
        %793 = vst [vmem:[%s322 + $0x18] sm:$0xff] %v777
        %794 = vst [vmem:[%s322 + $0x20] sm:$0xff] %v778
        %795 = vst [vmem:[%s322 + $0x28] sm:$0xff] %v779
        %796 = vst [vmem:[%s322 + $0x30] sm:$0xff] %v780
        %797 = vst [vmem:[%s322 + $0x38] sm:$0xff] %v781
        %798 = vst [vmem:[%s322 + $0x40] sm:$0xff] %v782
        %799 = vst [vmem:[%s322 + $0x48] sm:$0xff] %v783
        %800 = vst [vmem:[%s322 + $0x50] sm:$0xff] %v784
        %801 = vst [vmem:[%s322 + $0x58] sm:$0xff] %v785
        %802 = vst [vmem:[%s322 + $0x60] sm:$0xff] %v786
        %803 = vst [vmem:[%s322 + $0x68] sm:$0xff] %v787
        %804 = vst [vmem:[%s322 + $0x70] sm:$0xff] %v788
        %805 = vst [vmem:[%s322 + $0x78] sm:$0xff] %v789
        %v806 = vmul.f32 %v711, %v711
        %v807 = vmul.f32 %v713, %v713
        %v808 = vmul.f32 %v715, %v715
        %v809 = vmul.f32 %v717, %v717
        %v810 = vmul.f32 %v719, %v719
        %v811 = vmul.f32 %v721, %v721
        %v812 = vmul.f32 %v723, %v723
        %v813 = vmul.f32 %v725, %v725
        %v814 = vmul.f32 %v727, %v727
        %v815 = vmul.f32 %v729, %v729
        %v816 = vmul.f32 %v731, %v731
        %v817 = vmul.f32 %v733, %v733
        %v818 = vmul.f32 %v735, %v735
        %v819 = vmul.f32 %v737, %v737
        %v820 = vmul.f32 %v739, %v739
        %v821 = vmul.f32 %v741, %v741
        %v822 = vmul.f32 %v694, %v694
        %v823 = vmul.f32 %v695, %v695
        %v824 = vmul.f32 %v696, %v696
        %v825 = vmul.f32 %v697, %v697
        %v826 = vmul.f32 %v698, %v698
        %v827 = vmul.f32 %v699, %v699
        %v828 = vmul.f32 %v700, %v700
        %v829 = vmul.f32 %v701, %v701
        %v830 = vmul.f32 %v702, %v702
        %v831 = vmul.f32 %v703, %v703
        %v832 = vmul.f32 %v704, %v704
        %v833 = vmul.f32 %v705, %v705
        %v834 = vmul.f32 %v706, %v706
        %v835 = vmul.f32 %v707, %v707
        %v836 = vmul.f32 %v708, %v708
        %v837 = vmul.f32 %v709, %v709
        %v838 = vadd.f32 %v806, %v822
        %v839 = vadd.f32 %v807, %v823
        %v840 = vadd.f32 %v808, %v824
        %v841 = vadd.f32 %v809, %v825
        %v842 = vadd.f32 %v810, %v826
        %v843 = vadd.f32 %v811, %v827
        %v844 = vadd.f32 %v812, %v828
        %v845 = vadd.f32 %v813, %v829
        %v846 = vadd.f32 %v814, %v830
        %v847 = vadd.f32 %v815, %v831
        %v848 = vadd.f32 %v816, %v832
        %v849 = vadd.f32 %v817, %v833
        %v850 = vadd.f32 %v818, %v834
        %v851 = vadd.f32 %v819, %v835
        %v852 = vadd.f32 %v820, %v836
        %v853 = vadd.f32 %v821, %v837
        %v854 = vsub.f32 %v838, %v647
        %v855 = vsub.f32 %v839, %v650
        %v856 = vsub.f32 %v840, %v653
        %v857 = vsub.f32 %v841, %v656
        %v858 = vsub.f32 %v842, %v659
        %v859 = vsub.f32 %v843, %v662
        %v860 = vsub.f32 %v844, %v665
        %v861 = vsub.f32 %v845, %v668
        %v862 = vsub.f32 %v846, %v671
        %v863 = vsub.f32 %v847, %v674
        %v864 = vsub.f32 %v848, %v677
        %v865 = vsub.f32 %v849, %v680
        %v866 = vsub.f32 %v850, %v683
        %v867 = vsub.f32 %v851, %v686
        %v868 = vsub.f32 %v852, %v689
        %v869 = vsub.f32 %v853, %v692
        %v870 = vsub.f32 %v854, 0.5
        %v871 = vsub.f32 %v855, 0.5
        %v872 = vsub.f32 %v856, 0.5
        %v873 = vsub.f32 %v857, 0.5
        %v874 = vsub.f32 %v858, 0.5
        %v875 = vsub.f32 %v859, 0.5
        %v876 = vsub.f32 %v860, 0.5
        %v877 = vsub.f32 %v861, 0.5
        %v878 = vsub.f32 %v862, 0.5
        %v879 = vsub.f32 %v863, 0.5
        %v880 = vsub.f32 %v864, 0.5
        %v881 = vsub.f32 %v865, 0.5
        %v882 = vsub.f32 %v866, 0.5
        %v883 = vsub.f32 %v867, 0.5
        %v884 = vsub.f32 %v868, 0.5
        %v885 = vsub.f32 %v869, 0.5
        %v886 = vadd.f32 %v870, %v871
        %v887 = vadd.f32 %v886, %v872
        %v888 = vadd.f32 %v887, %v873
        %v889 = vadd.f32 %v888, %v874
        %v890 = vadd.f32 %v889, %v875
        %v891 = vadd.f32 %v890, %v876
        %v892 = vadd.f32 %v891, %v877
        %v893 = vadd.f32 %v892, %v878
        %v894 = vadd.f32 %v893, %v879
        %v895 = vadd.f32 %v894, %v880
        %v896 = vadd.f32 %v895, %v881
        %v897 = vadd.f32 %v896, %v882
        %v898 = vadd.f32 %v897, %v883
        %v899 = vadd.f32 %v898, %v884
        %v900 = vadd.f32 %v899, %v885
        %v901 = vrot.slane %v900, 4
        %v902 = vadd.f32 %v900, %v901
        %v903 = vrot.slane %v902, 2
        %v904 = vadd.f32 %v902, %v903
        %v905 = vrot.slane %v904, 1
        %v906 = vadd.f32 %v904, %v905
        %907 = vst [vmem:[%s328] sm:$0x1] %v906
        %s908 = sand.u32 %s132, 1
        %s909 = scalar_lea.sflag [#allocation4], %s908
        %s910 = sand.u32 %s132, 1
        %s911 = smul.addr %s910, 128
        %s912 = scalar_lea.vmem [#allocation10], %s911
        %s913 = sand.u32 %s158, 1
        %s914 = scalar_lea.sflag [#allocation12], %s913
        %s915 = sand.u32 %s158, 1
        %s916 = scalar_lea.vmem [#allocation11], %s915
        // Predicated region
        $region53: #{tpu_custom_call.1} parent=35 // pred_check
          %p917 = pneg %p142
        $region54: #{tpu_custom_call.1} parent=35 // pred_check_branch
          %919 = sbr.rel (%p917) target = $region56
        $region55: #{tpu_custom_call.1} parent=35 // pred_region
          %s920 = smul.u32 16, %s30
          %922 = vsyncadd %s909, 0
          %s923 = smul.addr %s920, 8
          %s924 = scalar_lea.hbm %s4, %s923
          %s925 = sshll.u32 %s912, 4
          %s926 = int_to_ptr.vmem [resolvable:$true] %s925
          %s927 = sshll.u32 %s924, 4
          %s928 = int_to_ptr.hbm [resolvable:$true] %s927
          %933 = dma.vmem_to_hbm [thread:$0]  %s926, 2048, %s928, %s909, 128, 128, 8
        $region56: #{tpu_custom_call.1} parent=35 // pred_fallthru
          _
        // Predicated region
        $region57: #{tpu_custom_call.1} parent=35 // pred_check
          %p934 = pneg %p168
        $region58: #{tpu_custom_call.1} parent=35 // pred_check_branch
          %936 = sbr.rel (%p934) target = $region60
        $region59: #{tpu_custom_call.1} parent=35 // pred_region
          %938 = vsyncadd %s914, 0
          %s939 = scalar_lea.hbm %s5, %s30
          %s941 = sshll.u32 %s916, 4
          %s942 = int_to_ptr.vmem [resolvable:$true] %s941
          %s943 = sshll.u32 %s939, 4
          %s944 = int_to_ptr.hbm [resolvable:$true] %s943
          %946 = dma.vmem_to_hbm [thread:$0]  %s942, 16, %s944, %s914
        $region60: #{tpu_custom_call.1} parent=35 // pred_fallthru
          _
      $region36: #{tpu_custom_call.1} parent=5 // pred_fallthru
        _
      %p947 = scmp.le.s32.totalorder 2, %s25
      // Predicated region
      $region61: #{tpu_custom_call.1} parent=5 // pred_check
        %p948 = pneg %p947
      $region62: #{tpu_custom_call.1} parent=5 // pred_check_branch
        %950 = sbr.rel (%p948) target = $region64
      $region63: #{tpu_custom_call.1} parent=5 // pred_region
        %s951 = ssub.s32 %s25, 2
        // Predicated region
        $region65: #{tpu_custom_call.1} parent=63 // pred_check
          %p952 = pneg %p148
        $region66: #{tpu_custom_call.1} parent=63 // pred_check_branch
          %954 = sbr.rel (%p952) target = $region68
        $region67: #{tpu_custom_call.1} parent=63 // pred_region
          %s955 = sand.u32 %s133, 1
          %s956 = scalar_lea.sflag [#allocation4], %s955
          %s957 = sand.u32 %s133, 1
          %s958 = smul.addr %s957, 128
          %s959 = scalar_lea.vmem [#allocation10], %s958
          %961 = dma.done %s956, 2048
        $region68: #{tpu_custom_call.1} parent=63 // pred_fallthru
          _
        // Predicated region
        $region69: #{tpu_custom_call.1} parent=63 // pred_check
          %p962 = pneg %p174
        $region70: #{tpu_custom_call.1} parent=63 // pred_check_branch
          %964 = sbr.rel (%p962) target = $region72
        $region71: #{tpu_custom_call.1} parent=63 // pred_region
          %s965 = sand.u32 %s159, 1
          %s966 = scalar_lea.sflag [#allocation12], %s965
          %s967 = sand.u32 %s159, 1
          %s968 = scalar_lea.vmem [#allocation11], %s967
          %970 = dma.done %s966, 16
        $region72: #{tpu_custom_call.1} parent=63 // pred_fallthru
          _
      $region64: #{tpu_custom_call.1} parent=5 // pred_fallthru
        _
    $region6: #{tpu_custom_call.1} parent=1 // loop_footer
      %s29 = sadd.s32 1, %s25
    $region7: #{tpu_custom_call.1} parent=1 // loop_footer_branch
      %24 = sbr.rel target = $region3
    $region8: #{tpu_custom_call.1} parent=1 // loop_exit
      _
    %971 = vsyncpa [#allocation3], 1
    %s972 = scalar_lea.sflag [#allocation3], 1
    %973 = vsyncpa %s972, 1
    %974 = vsyncpa [#allocation6], 1
    %975 = vsyncpa [#allocation9], 1
    %s976 = scalar_lea.sflag [#allocation9], 1
    %977 = vsyncpa %s976, 1
    %978 = vsyncpa [#allocation4], 1
    %s979 = scalar_lea.sflag [#allocation4], 1
    %980 = vsyncpa %s979, 1
    %981 = vsyncpa [#allocation12], 1
    %s982 = scalar_lea.sflag [#allocation12], 1
    %983 = vsyncpa %s982, 1

</llo_original>
